<compile_context>
chip_gen: v5e
topology: v5e:2x2
jax: 0.10.0
libtpu: 0.0.40
codegen_flags: <defaults>
</compile_context>

<pallas_src>
import functools

import numpy as np
import jax
import jax.numpy as jnp
from jax import lax
from jax.experimental import pallas as pl
from jax.experimental.pallas import tpu as pltpu

LANES = 128


# ---------------------------------------------------------------------------
# Fused forward kernel: conv1 -> pool -> conv2 -> pool -> linear classifier
# (one image per grid step; all weights resident in VMEM across the grid)
# ---------------------------------------------------------------------------
def _fused_forward_kernel(x_ref, w1_ref, b1_ref, w2_ref, b2_ref, wc_ref, bc_ref,
                          o_ref, *, H, W, Cin, C1, C2):
    """
    x_ref : (1, H, W*Cin)            f32  image, lanes = w*Cin + c
    w1_ref: (3, W*Cin, W*C1)         bf16 per-kernel-row shifted block weights;
                                          cols [0:L1] -> even-w conv outputs,
                                          cols [L1:2*L1] -> odd-w outputs
    b1_ref: (1, L1)                  f32  bias tiled per lane (wo*C1 + c)
    w2_ref: (3, (W//2)*C1, (W//2)*C2) bf16  same packing for layer 2
    b2_ref: (1, L2)                  f32
    wc_ref: (H//4, L2, LANES)        bf16 classifier weight per pooled row
    bc_ref: (1, LANES)               f32  classifier bias (zero-padded)
    o_ref : (1, 1, LANES)            f32  class scores
    """
    H2, W2 = H // 2, W // 2
    H4, W4 = H // 4, W // 4
    L1 = W2 * C1
    L2 = W4 * C2

    # ---- conv1 (3x3 SAME) + 2x2 max-pool + bias + ReLU --------------------
    xv = x_ref[0]                                           # (H, W*Cin) f32
    zrow1 = jnp.zeros((1, W * Cin), jnp.float32)
    xp = jnp.concatenate([zrow1, xv, zrow1], axis=0)        # row-padded input
    acc1 = None
    for di in range(3):                                     # 3 MXU dots
        patch = xp[di:di + H, :].astype(jnp.bfloat16)       # (H, W*Cin)
        part = jnp.dot(patch, w1_ref[di],
                       preferred_element_type=jnp.float32)  # (H, W*C1)
        acc1 = part if acc1 is None else acc1 + part
    # horizontal half of the pool: even-w vs odd-w lane halves
    hm1 = jnp.maximum(acc1[:, :L1], acc1[:, L1:])           # (H, L1)

    # vertical half + bias + ReLU (pool commutes with bias+ReLU: monotone).
    # The pooled rows (plus zero rows) directly form the row-padded conv2 input.
    b1 = b1_ref[...]
    zrow2 = jnp.zeros((1, L1), jnp.float32)
    rows = [zrow2]
    for i in range(H2):
        v = jnp.maximum(hm1[2 * i:2 * i + 1, :], hm1[2 * i + 1:2 * i + 2, :])
        rows.append(jnp.maximum(v + b1, 0.0))
    rows.append(zrow2)
    x2 = jnp.concatenate(rows, axis=0)                      # (H2+2, W2*C1)

    # ---- conv2 (3x3 SAME) + 2x2 max-pool + bias + ReLU --------------------
    acc2 = None
    for di in range(3):                                     # 3 MXU dots
        patch = x2[di:di + H2, :].astype(jnp.bfloat16)      # (H2, W2*C1)
        part = jnp.dot(patch, w2_ref[di],
                       preferred_element_type=jnp.float32)  # (H2, W2*C2)
        acc2 = part if acc2 is None else acc2 + part
    hm2 = jnp.maximum(acc2[:, :L2], acc2[:, L2:])           # (H2, L2)

    # ---- classifier: per pooled row, multiply-accumulate into the scores --
    b2 = b2_ref[...]
    sc = bc_ref[...]                                        # (1, LANES) f32
    for r in range(H4):
        v = jnp.maximum(hm2[2 * r:2 * r + 1, :], hm2[2 * r + 1:2 * r + 2, :])
        y2r = jnp.maximum(v + b2, 0.0).astype(jnp.bfloat16)  # (1, L2)
        sc = sc + jnp.dot(y2r, wc_ref[r],
                          preferred_element_type=jnp.float32)
    o_ref[0] = sc                                            # lane-dense store


def fused_forward(x2d, w1, b1, w2, b2, wc, bc, *, H, W, Cin, C1, C2):
    """x2d: (N, H, W*Cin) f32.  Returns (N, 1, LANES) f32 class scores."""
    N = x2d.shape[0]
    kernel = functools.partial(_fused_forward_kernel,
                               H=H, W=W, Cin=Cin, C1=C1, C2=C2)
    return pl.pallas_call(
        kernel,
        out_shape=jax.ShapeDtypeStruct((N, 1, LANES), jnp.float32),
        grid_spec=pltpu.PrefetchScalarGridSpec(
            num_scalar_prefetch=0,
            grid=(N,),
            in_specs=[
                pl.BlockSpec((1, H, W * Cin), lambda n: (n, 0, 0)),
                pl.BlockSpec(w1.shape, lambda n: (0, 0, 0)),
                pl.BlockSpec(b1.shape, lambda n: (0, 0)),
                pl.BlockSpec(w2.shape, lambda n: (0, 0, 0)),
                pl.BlockSpec(b2.shape, lambda n: (0, 0)),
                pl.BlockSpec(wc.shape, lambda n: (0, 0, 0)),
                pl.BlockSpec(bc.shape, lambda n: (0, 0)),
            ],
            out_specs=pl.BlockSpec((1, 1, LANES), lambda n: (n, 0, 0)),
        ),
        compiler_params=pltpu.CompilerParams(
            dimension_semantics=("parallel",)),
    )(x2d, w1, b1, w2, b2, wc, bc)


# ---------------------------------------------------------------------------
# One-time weight packing (done at init, not inside the jitted forward)
# ---------------------------------------------------------------------------
def _pack_conv_weights(w_oihw, width):
    """(Cout,Cin,3,3) PyTorch conv weight -> (3, width*Cin, width*Cout) bf16.
    For kernel row di, the matrix maps input column w_in to output column
    (wo, parity) for every kernel column dj with w_in = 2*wo + parity + dj - 1;
    SAME horizontal padding = simply no block for out-of-range w_in."""
    w = np.asarray(w_oihw, np.float32)
    Cout, Cin, _, _ = w.shape
    Wo = width // 2
    L = Wo * Cout
    wt = np.transpose(w, (2, 3, 1, 0))                      # (3,3,Cin,Cout)
    A = np.zeros((3, width * Cin, 2 * L), np.float32)
    for di in range(3):
        for dj in range(3):
            for par in range(2):                            # even / odd output w
                for wo in range(Wo):
                    w_in = 2 * wo + par + dj - 1
                    if 0 <= w_in < width:
                        A[di,
                          w_in * Cin:(w_in + 1) * Cin,
                          par * L + wo * Cout: par * L + (wo + 1) * Cout] = wt[di, dj]
    return jnp.asarray(A, jnp.bfloat16)


def _pack_classifier(cls_w, cls_b, hf, wf, ch, lanes=LANES):
    """PyTorch Linear weight (num_class, ch*hf*wf) in NCHW-flatten order ->
    (hf, wf*ch, lanes) bf16 matching the kernel's per-row (w, c) feature
    lanes, padded to `lanes` output columns."""
    num_class = cls_w.shape[0]
    w = np.asarray(cls_w, np.float32).reshape(num_class, ch, hf, wf)
    w = np.transpose(w, (2, 3, 1, 0)).reshape(hf, wf * ch, num_class)
    wp = np.zeros((hf, wf * ch, lanes), np.float32)
    wp[:, :, :num_class] = w
    bp = np.zeros((1, lanes), np.float32)
    bp[0, :num_class] = np.asarray(cls_b, np.float32)
    return jnp.asarray(wp, jnp.bfloat16), jnp.asarray(bp, jnp.float32)


def init_params(key, *, num_class, in_ch, hid1, hid2, hw):
    assert hw % 4 == 0 and num_class <= LANES
    k1, k2, k3, k4, k5 = jax.random.split(key, 5)
    conv1_w = 0.1 * jax.random.normal(k1, (hid1, in_ch, 3, 3), jnp.float32)
    conv1_b = 0.05 * jax.random.normal(k2, (hid1,), jnp.float32)
    conv2_w = 0.1 * jax.random.normal(k3, (hid2, hid1, 3, 3), jnp.float32)
    conv2_b = 0.05 * jax.random.normal(k4, (hid2,), jnp.float32)
    hf = wf = hw // 4
    feat_dim = hid2 * hf * wf                               # feature.final_feat_dim
    cls_w = 0.1 * jax.random.normal(k5, (num_class, feat_dim), jnp.float32)
    cls_b = jnp.zeros((num_class,), jnp.float32)            # bias.data.fill_(0)

    cls_wp, cls_bp = _pack_classifier(cls_w, cls_b, hf, wf, hid2)
    params = {
        "conv1_w": _pack_conv_weights(conv1_w, hw),
        "conv1_b": jnp.tile(conv1_b, hw // 2).reshape(1, -1).astype(jnp.float32),
        "conv2_w": _pack_conv_weights(conv2_w, hw // 2),
        "conv2_b": jnp.tile(conv2_b, hw // 4).reshape(1, -1).astype(jnp.float32),
        "cls_w": cls_wp,
        "cls_b": cls_bp,
    }
    raw = {"conv1_w": conv1_w, "conv1_b": conv1_b,
           "conv2_w": conv2_w, "conv2_b": conv2_b,
           "cls_w": cls_w, "cls_b": cls_b}
    return params, raw


# ---------------------------------------------------------------------------
# forward = classifier(feature(x))
# ---------------------------------------------------------------------------
def build_forward(num_class):
    @jax.jit
    def forward(params, x_nchw):
        N, Cin, H, W = x_nchw.shape
        C1 = params["conv1_b"].shape[1] // (W // 2)
        C2 = params["conv2_b"].shape[1] // (W // 4)
        # NCHW -> per-image 2-D layout (rows = h, lanes = w*C + c).
        x = jnp.transpose(x_nchw, (0, 2, 3, 1)).reshape(N, H, W * Cin)
        scores = fused_forward(x, params["conv1_w"], params["conv1_b"],
                               params["conv2_w"], params["conv2_b"],
                               params["cls_w"], params["cls_b"],
                               H=H, W=W, Cin=Cin, C1=C1, C2=C2)
        return scores.reshape(N, LANES)[:, :num_class]
    return forward


# ---------------------------------------------------------------------------
# Pure-JAX reference (matches the kernel's bf16 rounding points)
# ---------------------------------------------------------------------------
def reference_forward(x_nchw, raw):
    bf = lambda a: a.astype(jnp.bfloat16).astype(jnp.float32)

    def conv_block(x, w, b):
        y = lax.conv_general_dilated(
            bf(x), bf(w), window_strides=(1, 1), padding="SAME",
            dimension_numbers=("NCHW", "OIHW", "NCHW"),
            precision=lax.Precision.HIGHEST)
        y = jnp.maximum(y + b[None, :, None, None], 0.0)
        n, c, h, wd = y.shape
        return y.reshape(n, c, h // 2, 2, wd // 2, 2).max(axis=(3, 5))

    y = conv_block(x_nchw, raw["conv1_w"], raw["conv1_b"])
    y = conv_block(y, raw["conv2_w"], raw["conv2_b"])
    feats = y.reshape(y.shape[0], -1)                       # NCHW flatten
    return jnp.dot(bf(feats), bf(raw["cls_w"]).T,
                   precision=lax.Precision.HIGHEST) + raw["cls_b"][None, :]


if __name__ == "__main__":
    key = jax.random.PRNGKey(0)
    kx, kp = jax.random.split(key)

    N, C, HW = 2, 3, 16
    NUM_CLASS = 5
    x = jax.random.normal(kx, (N, C, HW, HW), jnp.float32)   # NCHW like PyTorch
    params, raw = init_params(kp, num_class=NUM_CLASS, in_ch=C,
                              hid1=8, hid2=16, hw=HW)

    forward = build_forward(NUM_CLASS)
    scores = forward(params, x)
    jax.block_until_ready(scores)
    assert scores.shape == (N, NUM_CLASS) and scores.dtype == jnp.float32

    ref = reference_forward(x, raw)
    np.testing.assert_allclose(np.asarray(scores), np.asarray(ref),
                               rtol=2e-3, atol=2e-3)
    print("KERNEL_OK")
</pallas_src>

<mosaic_0001>
module attributes {stable_mosaic.version = 11 : i64} {
  func.func @_fused_forward_kernel(%arg0: i32, %arg1: memref<1x16x48xf32, #tpu.memory_space<vmem>>, %arg2: memref<3x48x128xbf16, #tpu.memory_space<vmem>>, %arg3: memref<1x64xf32, #tpu.memory_space<vmem>>, %arg4: memref<3x64x128xbf16, #tpu.memory_space<vmem>>, %arg5: memref<1x64xf32, #tpu.memory_space<vmem>>, %arg6: memref<4x64x128xbf16, #tpu.memory_space<vmem>>, %arg7: memref<1x128xf32, #tpu.memory_space<vmem>>, %arg8: memref<1x1x128xf32, #tpu.memory_space<vmem>>) attributes {dimension_semantics = [#tpu.dimension_semantics<parallel>], iteration_bounds = array<i64: 2>, scalar_prefetch = 0 : i64, scratch_operands = 0 : i64, tpu.core_type = #tpu.core_type<tc>, window_params = [{transform_indices = @transform_0, window_bounds = array<i64: 1, 16, 48>}, {pipeline_mode = #tpu.pipeline_mode<synchronous>, transform_indices = @transform_1, window_bounds = array<i64: 3, 48, 128>}, {pipeline_mode = #tpu.pipeline_mode<synchronous>, transform_indices = @transform_2, window_bounds = array<i64: 1, 64>}, {pipeline_mode = #tpu.pipeline_mode<synchronous>, transform_indices = @transform_3, window_bounds = array<i64: 3, 64, 128>}, {pipeline_mode = #tpu.pipeline_mode<synchronous>, transform_indices = @transform_4, window_bounds = array<i64: 1, 64>}, {pipeline_mode = #tpu.pipeline_mode<synchronous>, transform_indices = @transform_5, window_bounds = array<i64: 4, 64, 128>}, {pipeline_mode = #tpu.pipeline_mode<synchronous>, transform_indices = @transform_6, window_bounds = array<i64: 1, 128>}, {transform_indices = @transform_7, window_bounds = array<i64: 1, 1, 128>}]} {
    %c0 = arith.constant 0 : index
    %c0_0 = arith.constant 0 : index
    %c0_1 = arith.constant 0 : index
    %0 = vector.load %arg1[%c0, %c0_0, %c0_1] : memref<1x16x48xf32, #tpu.memory_space<vmem>>, vector<1x16x48xf32>
    %1 = vector.shape_cast %0 : vector<1x16x48xf32> to vector<16x48xf32>
    %cst = arith.constant 0.000000e+00 : f32
    %2 = vector.broadcast %cst : f32 to vector<1x48xf32>
    %3 = tpu.concatenate %2, %1, %2 in 0 : vector<1x48xf32>, vector<16x48xf32>, vector<1x48xf32> -> vector<18x48xf32>
    %4 = vector.extract_strided_slice %3 {offsets = [0, 0], sizes = [16, 48], strides = [1, 1]} : vector<18x48xf32> to vector<16x48xf32>
    %5 = arith.truncf %4 : vector<16x48xf32> to vector<16x48xbf16>
    %c0_2 = arith.constant 0 : index
    %c0_3 = arith.constant 0 : index
    %c0_4 = arith.constant 0 : index
    %6 = vector.load %arg2[%c0_2, %c0_3, %c0_4] : memref<3x48x128xbf16, #tpu.memory_space<vmem>>, vector<1x48x128xbf16>
    %7 = vector.shape_cast %6 : vector<1x48x128xbf16> to vector<48x128xbf16>
    %cst_5 = arith.constant dense<0.000000e+00> : vector<16x128xf32>
    %8 = tpu.matmul %5, %7, %cst_5 {dimension_numbers = #tpu.dot_dimension_numbers<[1], [0], [0], [1], [0, 0, 1, 1], [], []>} : vector<16x48xbf16>, vector<48x128xbf16>, vector<16x128xf32> -> vector<16x128xf32>
    %9 = vector.extract_strided_slice %3 {offsets = [1, 0], sizes = [16, 48], strides = [1, 1]} : vector<18x48xf32> to vector<16x48xf32>
    %10 = arith.truncf %9 : vector<16x48xf32> to vector<16x48xbf16>
    %c1 = arith.constant 1 : index
    %c0_6 = arith.constant 0 : index
    %c0_7 = arith.constant 0 : index
    %11 = vector.load %arg2[%c1, %c0_6, %c0_7] : memref<3x48x128xbf16, #tpu.memory_space<vmem>>, vector<1x48x128xbf16>
    %12 = vector.shape_cast %11 : vector<1x48x128xbf16> to vector<48x128xbf16>
    %cst_8 = arith.constant dense<0.000000e+00> : vector<16x128xf32>
    %13 = tpu.matmul %10, %12, %cst_8 {dimension_numbers = #tpu.dot_dimension_numbers<[1], [0], [0], [1], [0, 0, 1, 1], [], []>} : vector<16x48xbf16>, vector<48x128xbf16>, vector<16x128xf32> -> vector<16x128xf32>
    %14 = arith.addf %8, %13 : vector<16x128xf32>
    %15 = vector.extract_strided_slice %3 {offsets = [2, 0], sizes = [16, 48], strides = [1, 1]} : vector<18x48xf32> to vector<16x48xf32>
    %16 = arith.truncf %15 : vector<16x48xf32> to vector<16x48xbf16>
    %c2 = arith.constant 2 : index
    %c0_9 = arith.constant 0 : index
    %c0_10 = arith.constant 0 : index
    %17 = vector.load %arg2[%c2, %c0_9, %c0_10] : memref<3x48x128xbf16, #tpu.memory_space<vmem>>, vector<1x48x128xbf16>
    %18 = vector.shape_cast %17 : vector<1x48x128xbf16> to vector<48x128xbf16>
    %cst_11 = arith.constant dense<0.000000e+00> : vector<16x128xf32>
    %19 = tpu.matmul %16, %18, %cst_11 {dimension_numbers = #tpu.dot_dimension_numbers<[1], [0], [0], [1], [0, 0, 1, 1], [], []>} : vector<16x48xbf16>, vector<48x128xbf16>, vector<16x128xf32> -> vector<16x128xf32>
    %20 = arith.addf %14, %19 : vector<16x128xf32>
    %21 = vector.extract_strided_slice %20 {offsets = [0, 0], sizes = [16, 64], strides = [1, 1]} : vector<16x128xf32> to vector<16x64xf32>
    %22 = vector.extract_strided_slice %20 {offsets = [0, 64], sizes = [16, 64], strides = [1, 1]} : vector<16x128xf32> to vector<16x64xf32>
    %23 = arith.maximumf %21, %22 : vector<16x64xf32>
    %c0_12 = arith.constant 0 : index
    %c0_13 = arith.constant 0 : index
    %24 = vector.load %arg3[%c0_12, %c0_13] : memref<1x64xf32, #tpu.memory_space<vmem>>, vector<1x64xf32>
    %cst_14 = arith.constant 0.000000e+00 : f32
    %25 = vector.broadcast %cst_14 : f32 to vector<1x64xf32>
    %26 = vector.extract_strided_slice %23 {offsets = [0, 0], sizes = [1, 64], strides = [1, 1]} : vector<16x64xf32> to vector<1x64xf32>
    %27 = vector.extract_strided_slice %23 {offsets = [1, 0], sizes = [1, 64], strides = [1, 1]} : vector<16x64xf32> to vector<1x64xf32>
    %28 = arith.maximumf %26, %27 : vector<1x64xf32>
    %29 = arith.addf %28, %24 : vector<1x64xf32>
    %cst_15 = arith.constant 0.000000e+00 : f32
    %30 = vector.broadcast %cst_15 : f32 to vector<1x64xf32>
    %31 = arith.maximumf %29, %30 : vector<1x64xf32>
    %32 = vector.extract_strided_slice %23 {offsets = [2, 0], sizes = [1, 64], strides = [1, 1]} : vector<16x64xf32> to vector<1x64xf32>
    %33 = vector.extract_strided_slice %23 {offsets = [3, 0], sizes = [1, 64], strides = [1, 1]} : vector<16x64xf32> to vector<1x64xf32>
    %34 = arith.maximumf %32, %33 : vector<1x64xf32>
    %35 = arith.addf %34, %24 : vector<1x64xf32>
    %cst_16 = arith.constant 0.000000e+00 : f32
    %36 = vector.broadcast %cst_16 : f32 to vector<1x64xf32>
    %37 = arith.maximumf %35, %36 : vector<1x64xf32>
    %38 = vector.extract_strided_slice %23 {offsets = [4, 0], sizes = [1, 64], strides = [1, 1]} : vector<16x64xf32> to vector<1x64xf32>
    %39 = vector.extract_strided_slice %23 {offsets = [5, 0], sizes = [1, 64], strides = [1, 1]} : vector<16x64xf32> to vector<1x64xf32>
    %40 = arith.maximumf %38, %39 : vector<1x64xf32>
    %41 = arith.addf %40, %24 : vector<1x64xf32>
    %cst_17 = arith.constant 0.000000e+00 : f32
    %42 = vector.broadcast %cst_17 : f32 to vector<1x64xf32>
    %43 = arith.maximumf %41, %42 : vector<1x64xf32>
    %44 = vector.extract_strided_slice %23 {offsets = [6, 0], sizes = [1, 64], strides = [1, 1]} : vector<16x64xf32> to vector<1x64xf32>
    %45 = vector.extract_strided_slice %23 {offsets = [7, 0], sizes = [1, 64], strides = [1, 1]} : vector<16x64xf32> to vector<1x64xf32>
    %46 = arith.maximumf %44, %45 : vector<1x64xf32>
    %47 = arith.addf %46, %24 : vector<1x64xf32>
    %cst_18 = arith.constant 0.000000e+00 : f32
    %48 = vector.broadcast %cst_18 : f32 to vector<1x64xf32>
    %49 = arith.maximumf %47, %48 : vector<1x64xf32>
    %50 = vector.extract_strided_slice %23 {offsets = [8, 0], sizes = [1, 64], strides = [1, 1]} : vector<16x64xf32> to vector<1x64xf32>
    %51 = vector.extract_strided_slice %23 {offsets = [9, 0], sizes = [1, 64], strides = [1, 1]} : vector<16x64xf32> to vector<1x64xf32>
    %52 = arith.maximumf %50, %51 : vector<1x64xf32>
    %53 = arith.addf %52, %24 : vector<1x64xf32>
    %cst_19 = arith.constant 0.000000e+00 : f32
    %54 = vector.broadcast %cst_19 : f32 to vector<1x64xf32>
    %55 = arith.maximumf %53, %54 : vector<1x64xf32>
    %56 = vector.extract_strided_slice %23 {offsets = [10, 0], sizes = [1, 64], strides = [1, 1]} : vector<16x64xf32> to vector<1x64xf32>
    %57 = vector.extract_strided_slice %23 {offsets = [11, 0], sizes = [1, 64], strides = [1, 1]} : vector<16x64xf32> to vector<1x64xf32>
    %58 = arith.maximumf %56, %57 : vector<1x64xf32>
    %59 = arith.addf %58, %24 : vector<1x64xf32>
    %cst_20 = arith.constant 0.000000e+00 : f32
    %60 = vector.broadcast %cst_20 : f32 to vector<1x64xf32>
    %61 = arith.maximumf %59, %60 : vector<1x64xf32>
    %62 = vector.extract_strided_slice %23 {offsets = [12, 0], sizes = [1, 64], strides = [1, 1]} : vector<16x64xf32> to vector<1x64xf32>
    %63 = vector.extract_strided_slice %23 {offsets = [13, 0], sizes = [1, 64], strides = [1, 1]} : vector<16x64xf32> to vector<1x64xf32>
    %64 = arith.maximumf %62, %63 : vector<1x64xf32>
    %65 = arith.addf %64, %24 : vector<1x64xf32>
    %cst_21 = arith.constant 0.000000e+00 : f32
    %66 = vector.broadcast %cst_21 : f32 to vector<1x64xf32>
    %67 = arith.maximumf %65, %66 : vector<1x64xf32>
    %68 = vector.extract_strided_slice %23 {offsets = [14, 0], sizes = [1, 64], strides = [1, 1]} : vector<16x64xf32> to vector<1x64xf32>
    %69 = vector.extract_strided_slice %23 {offsets = [15, 0], sizes = [1, 64], strides = [1, 1]} : vector<16x64xf32> to vector<1x64xf32>
    %70 = arith.maximumf %68, %69 : vector<1x64xf32>
    %71 = arith.addf %70, %24 : vector<1x64xf32>
    %cst_22 = arith.constant 0.000000e+00 : f32
    %72 = vector.broadcast %cst_22 : f32 to vector<1x64xf32>
    %73 = arith.maximumf %71, %72 : vector<1x64xf32>
    %74 = tpu.concatenate %25, %31, %37, %43, %49, %55, %61, %67, %73, %25 in 0 : vector<1x64xf32>, vector<1x64xf32>, vector<1x64xf32>, vector<1x64xf32>, vector<1x64xf32>, vector<1x64xf32>, vector<1x64xf32>, vector<1x64xf32>, vector<1x64xf32>, vector<1x64xf32> -> vector<10x64xf32>
    %75 = vector.extract_strided_slice %74 {offsets = [0, 0], sizes = [8, 64], strides = [1, 1]} : vector<10x64xf32> to vector<8x64xf32>
    %76 = arith.truncf %75 : vector<8x64xf32> to vector<8x64xbf16>
    %c0_23 = arith.constant 0 : index
    %c0_24 = arith.constant 0 : index
    %c0_25 = arith.constant 0 : index
    %77 = vector.load %arg4[%c0_23, %c0_24, %c0_25] : memref<3x64x128xbf16, #tpu.memory_space<vmem>>, vector<1x64x128xbf16>
    %78 = vector.shape_cast %77 : vector<1x64x128xbf16> to vector<64x128xbf16>
    %cst_26 = arith.constant dense<0.000000e+00> : vector<8x128xf32>
    %79 = tpu.matmul %76, %78, %cst_26 {dimension_numbers = #tpu.dot_dimension_numbers<[1], [0], [0], [1], [0, 0, 1, 1], [], []>} : vector<8x64xbf16>, vector<64x128xbf16>, vector<8x128xf32> -> vector<8x128xf32>
    %80 = vector.extract_strided_slice %74 {offsets = [1, 0], sizes = [8, 64], strides = [1, 1]} : vector<10x64xf32> to vector<8x64xf32>
    %81 = arith.truncf %80 : vector<8x64xf32> to vector<8x64xbf16>
    %c1_27 = arith.constant 1 : index
    %c0_28 = arith.constant 0 : index
    %c0_29 = arith.constant 0 : index
    %82 = vector.load %arg4[%c1_27, %c0_28, %c0_29] : memref<3x64x128xbf16, #tpu.memory_space<vmem>>, vector<1x64x128xbf16>
    %83 = vector.shape_cast %82 : vector<1x64x128xbf16> to vector<64x128xbf16>
    %cst_30 = arith.constant dense<0.000000e+00> : vector<8x128xf32>
    %84 = tpu.matmul %81, %83, %cst_30 {dimension_numbers = #tpu.dot_dimension_numbers<[1], [0], [0], [1], [0, 0, 1, 1], [], []>} : vector<8x64xbf16>, vector<64x128xbf16>, vector<8x128xf32> -> vector<8x128xf32>
    %85 = arith.addf %79, %84 : vector<8x128xf32>
    %86 = vector.extract_strided_slice %74 {offsets = [2, 0], sizes = [8, 64], strides = [1, 1]} : vector<10x64xf32> to vector<8x64xf32>
    %87 = arith.truncf %86 : vector<8x64xf32> to vector<8x64xbf16>
    %c2_31 = arith.constant 2 : index
    %c0_32 = arith.constant 0 : index
    %c0_33 = arith.constant 0 : index
    %88 = vector.load %arg4[%c2_31, %c0_32, %c0_33] : memref<3x64x128xbf16, #tpu.memory_space<vmem>>, vector<1x64x128xbf16>
    %89 = vector.shape_cast %88 : vector<1x64x128xbf16> to vector<64x128xbf16>
    %cst_34 = arith.constant dense<0.000000e+00> : vector<8x128xf32>
    %90 = tpu.matmul %87, %89, %cst_34 {dimension_numbers = #tpu.dot_dimension_numbers<[1], [0], [0], [1], [0, 0, 1, 1], [], []>} : vector<8x64xbf16>, vector<64x128xbf16>, vector<8x128xf32> -> vector<8x128xf32>
    %91 = arith.addf %85, %90 : vector<8x128xf32>
    %92 = vector.extract_strided_slice %91 {offsets = [0, 0], sizes = [8, 64], strides = [1, 1]} : vector<8x128xf32> to vector<8x64xf32>
    %93 = vector.extract_strided_slice %91 {offsets = [0, 64], sizes = [8, 64], strides = [1, 1]} : vector<8x128xf32> to vector<8x64xf32>
    %94 = arith.maximumf %92, %93 : vector<8x64xf32>
    %c0_35 = arith.constant 0 : index
    %c0_36 = arith.constant 0 : index
    %95 = vector.load %arg5[%c0_35, %c0_36] : memref<1x64xf32, #tpu.memory_space<vmem>>, vector<1x64xf32>
    %c0_37 = arith.constant 0 : index
    %c0_38 = arith.constant 0 : index
    %96 = vector.load %arg7[%c0_37, %c0_38] : memref<1x128xf32, #tpu.memory_space<vmem>>, vector<1x128xf32>
    %97 = vector.extract_strided_slice %94 {offsets = [0, 0], sizes = [1, 64], strides = [1, 1]} : vector<8x64xf32> to vector<1x64xf32>
    %98 = vector.extract_strided_slice %94 {offsets = [1, 0], sizes = [1, 64], strides = [1, 1]} : vector<8x64xf32> to vector<1x64xf32>
    %99 = arith.maximumf %97, %98 : vector<1x64xf32>
    %100 = arith.addf %99, %95 : vector<1x64xf32>
    %cst_39 = arith.constant 0.000000e+00 : f32
    %101 = vector.broadcast %cst_39 : f32 to vector<1x64xf32>
    %102 = arith.maximumf %100, %101 : vector<1x64xf32>
    %103 = arith.truncf %102 : vector<1x64xf32> to vector<1x64xbf16>
    %c0_40 = arith.constant 0 : index
    %c0_41 = arith.constant 0 : index
    %c0_42 = arith.constant 0 : index
    %104 = vector.load %arg6[%c0_40, %c0_41, %c0_42] : memref<4x64x128xbf16, #tpu.memory_space<vmem>>, vector<1x64x128xbf16>
    %105 = vector.shape_cast %104 : vector<1x64x128xbf16> to vector<64x128xbf16>
    %cst_43 = arith.constant dense<0.000000e+00> : vector<1x128xf32>
    %106 = tpu.matmul %103, %105, %cst_43 {dimension_numbers = #tpu.dot_dimension_numbers<[1], [0], [0], [1], [0, 0, 1, 1], [], []>} : vector<1x64xbf16>, vector<64x128xbf16>, vector<1x128xf32> -> vector<1x128xf32>
    %107 = arith.addf %96, %106 : vector<1x128xf32>
    %108 = vector.extract_strided_slice %94 {offsets = [2, 0], sizes = [1, 64], strides = [1, 1]} : vector<8x64xf32> to vector<1x64xf32>
    %109 = vector.extract_strided_slice %94 {offsets = [3, 0], sizes = [1, 64], strides = [1, 1]} : vector<8x64xf32> to vector<1x64xf32>
    %110 = arith.maximumf %108, %109 : vector<1x64xf32>
    %111 = arith.addf %110, %95 : vector<1x64xf32>
    %cst_44 = arith.constant 0.000000e+00 : f32
    %112 = vector.broadcast %cst_44 : f32 to vector<1x64xf32>
    %113 = arith.maximumf %111, %112 : vector<1x64xf32>
    %114 = arith.truncf %113 : vector<1x64xf32> to vector<1x64xbf16>
    %c1_45 = arith.constant 1 : index
    %c0_46 = arith.constant 0 : index
    %c0_47 = arith.constant 0 : index
    %115 = vector.load %arg6[%c1_45, %c0_46, %c0_47] : memref<4x64x128xbf16, #tpu.memory_space<vmem>>, vector<1x64x128xbf16>
    %116 = vector.shape_cast %115 : vector<1x64x128xbf16> to vector<64x128xbf16>
    %cst_48 = arith.constant dense<0.000000e+00> : vector<1x128xf32>
    %117 = tpu.matmul %114, %116, %cst_48 {dimension_numbers = #tpu.dot_dimension_numbers<[1], [0], [0], [1], [0, 0, 1, 1], [], []>} : vector<1x64xbf16>, vector<64x128xbf16>, vector<1x128xf32> -> vector<1x128xf32>
    %118 = arith.addf %107, %117 : vector<1x128xf32>
    %119 = vector.extract_strided_slice %94 {offsets = [4, 0], sizes = [1, 64], strides = [1, 1]} : vector<8x64xf32> to vector<1x64xf32>
    %120 = vector.extract_strided_slice %94 {offsets = [5, 0], sizes = [1, 64], strides = [1, 1]} : vector<8x64xf32> to vector<1x64xf32>
    %121 = arith.maximumf %119, %120 : vector<1x64xf32>
    %122 = arith.addf %121, %95 : vector<1x64xf32>
    %cst_49 = arith.constant 0.000000e+00 : f32
    %123 = vector.broadcast %cst_49 : f32 to vector<1x64xf32>
    %124 = arith.maximumf %122, %123 : vector<1x64xf32>
    %125 = arith.truncf %124 : vector<1x64xf32> to vector<1x64xbf16>
    %c2_50 = arith.constant 2 : index
    %c0_51 = arith.constant 0 : index
    %c0_52 = arith.constant 0 : index
    %126 = vector.load %arg6[%c2_50, %c0_51, %c0_52] : memref<4x64x128xbf16, #tpu.memory_space<vmem>>, vector<1x64x128xbf16>
    %127 = vector.shape_cast %126 : vector<1x64x128xbf16> to vector<64x128xbf16>
    %cst_53 = arith.constant dense<0.000000e+00> : vector<1x128xf32>
    %128 = tpu.matmul %125, %127, %cst_53 {dimension_numbers = #tpu.dot_dimension_numbers<[1], [0], [0], [1], [0, 0, 1, 1], [], []>} : vector<1x64xbf16>, vector<64x128xbf16>, vector<1x128xf32> -> vector<1x128xf32>
    %129 = arith.addf %118, %128 : vector<1x128xf32>
    %130 = vector.extract_strided_slice %94 {offsets = [6, 0], sizes = [1, 64], strides = [1, 1]} : vector<8x64xf32> to vector<1x64xf32>
    %131 = vector.extract_strided_slice %94 {offsets = [7, 0], sizes = [1, 64], strides = [1, 1]} : vector<8x64xf32> to vector<1x64xf32>
    %132 = arith.maximumf %130, %131 : vector<1x64xf32>
    %133 = arith.addf %132, %95 : vector<1x64xf32>
    %cst_54 = arith.constant 0.000000e+00 : f32
    %134 = vector.broadcast %cst_54 : f32 to vector<1x64xf32>
    %135 = arith.maximumf %133, %134 : vector<1x64xf32>
    %136 = arith.truncf %135 : vector<1x64xf32> to vector<1x64xbf16>
    %c3 = arith.constant 3 : index
    %c0_55 = arith.constant 0 : index
    %c0_56 = arith.constant 0 : index
    %137 = vector.load %arg6[%c3, %c0_55, %c0_56] : memref<4x64x128xbf16, #tpu.memory_space<vmem>>, vector<1x64x128xbf16>
    %138 = vector.shape_cast %137 : vector<1x64x128xbf16> to vector<64x128xbf16>
    %cst_57 = arith.constant dense<0.000000e+00> : vector<1x128xf32>
    %139 = tpu.matmul %136, %138, %cst_57 {dimension_numbers = #tpu.dot_dimension_numbers<[1], [0], [0], [1], [0, 0, 1, 1], [], []>} : vector<1x64xbf16>, vector<64x128xbf16>, vector<1x128xf32> -> vector<1x128xf32>
    %140 = arith.addf %129, %139 : vector<1x128xf32>
    %c0_58 = arith.constant 0 : index
    %c0_59 = arith.constant 0 : index
    %c0_60 = arith.constant 0 : index
    %141 = vector.load %arg8[%c0_58, %c0_59, %c0_60] : memref<1x1x128xf32, #tpu.memory_space<vmem>>, vector<1x1x128xf32>
    %142 = vector.shape_cast %141 : vector<1x1x128xf32> to vector<1x128xf32>
    %143 = vector.shape_cast %140 : vector<1x128xf32> to vector<1x1x128xf32>
    tpu.vector_store %arg8[%c0_58, %c0_59, %c0_60], %143 {strides = array<i32>} : memref<1x1x128xf32, #tpu.memory_space<vmem>>, vector<1x1x128xf32>,
    return
  }
  func.func @transform_0(%arg0: i32) -> (i32, i32, i32) {
    %c0_i32 = arith.constant 0 : i32
    %c0_i32_0 = arith.constant 0 : i32
    %c0_i32_1 = arith.constant 0 : i32
    return %arg0, %c0_i32, %c0_i32_0 : i32, i32, i32
  }
  func.func @transform_1(%arg0: i32) -> (i32, i32, i32) {
    %c0_i32 = arith.constant 0 : i32
    %c0_i32_0 = arith.constant 0 : i32
    %c0_i32_1 = arith.constant 0 : i32
    %c0_i32_2 = arith.constant 0 : i32
    return %c0_i32, %c0_i32_0, %c0_i32_1 : i32, i32, i32
  }
  func.func @transform_2(%arg0: i32) -> (i32, i32) {
    %c0_i32 = arith.constant 0 : i32
    %c0_i32_0 = arith.constant 0 : i32
    %c0_i32_1 = arith.constant 0 : i32
    return %c0_i32, %c0_i32_0 : i32, i32
  }
  func.func @transform_3(%arg0: i32) -> (i32, i32, i32) {
    %c0_i32 = arith.constant 0 : i32
    %c0_i32_0 = arith.constant 0 : i32
    %c0_i32_1 = arith.constant 0 : i32
    %c0_i32_2 = arith.constant 0 : i32
    return %c0_i32, %c0_i32_0, %c0_i32_1 : i32, i32, i32
  }
  func.func @transform_4(%arg0: i32) -> (i32, i32) {
    %c0_i32 = arith.constant 0 : i32
    %c0_i32_0 = arith.constant 0 : i32
    %c0_i32_1 = arith.constant 0 : i32
    return %c0_i32, %c0_i32_0 : i32, i32
  }
  func.func @transform_5(%arg0: i32) -> (i32, i32, i32) {
    %c0_i32 = arith.constant 0 : i32
    %c0_i32_0 = arith.constant 0 : i32
    %c0_i32_1 = arith.constant 0 : i32
    %c0_i32_2 = arith.constant 0 : i32
    return %c0_i32, %c0_i32_0, %c0_i32_1 : i32, i32, i32
  }
  func.func @transform_6(%arg0: i32) -> (i32, i32) {
    %c0_i32 = arith.constant 0 : i32
    %c0_i32_0 = arith.constant 0 : i32
    %c0_i32_1 = arith.constant 0 : i32
    return %c0_i32, %c0_i32_0 : i32, i32
  }
  func.func @transform_7(%arg0: i32) -> (i32, i32, i32) {
    %c0_i32 = arith.constant 0 : i32
    %c0_i32_0 = arith.constant 0 : i32
    %c0_i32_1 = arith.constant 0 : i32
    return %arg0, %c0_i32, %c0_i32_0 : i32, i32, i32
  }
}

</mosaic_0001>

<llo_original>
// kernel: forward.1
$region0: #{forward.1}
  #allocation0 [shape = 'u32[]', space=smem, size = 0x4, offset = 0x4, fixed_abs, tag = 'smem constant byte address 0x4 - core index']
  #allocation1 [shape = 'u32[72,128]{1,0:T(1,128)}', space=vmem, size = 0x9000, scoped, tag = 'internal scratch']
  %s0 = inlined_call_operand.vmem [shape: f32[2,16,48], index: 0, kind: input, shape index: {}]
  %s1 = inlined_call_operand.vmem [shape: bf16[3,48,128], index: 1, kind: input, shape index: {}]
  %s2 = inlined_call_operand.vmem [shape: f32[1,64], index: 2, kind: input, shape index: {}]
  %s3 = inlined_call_operand.vmem [shape: bf16[3,64,128], index: 3, kind: input, shape index: {}]
  %s4 = inlined_call_operand.vmem [shape: f32[1,64], index: 4, kind: input, shape index: {}]
  %s5 = inlined_call_operand.vmem [shape: bf16[4,64,128], index: 5, kind: input, shape index: {}]
  %s6 = inlined_call_operand.vmem [shape: f32[1,128], index: 6, kind: input, shape index: {}]
  %s7 = inlined_call_operand.hbm [shape: f32[2,1,128], index: 7, kind: output, shape index: {}]
  %s8 = sld [smem:[#allocation0]]
  $region61: #{forward.1} parent=0
    _
  %s10 = ssub.s32 1, %s8
  %s11 = scalar_select 0, %s10, %s8
  $region1: #{forward.1} parent=0
    #allocation2 [shape = 'u8[1024]{0}', space=vmem, size = 0x400, scoped, tag = 'output window, operand 0']
    #allocation3 [shape = 's32[2]{0}', space=sflag, size = 0x8, scoped, tag = 'scoped memory for forward.1']
    %12 = vsyncpa [#allocation3], 0
    %s13 = scalar_lea.sflag [#allocation3], 1
    %14 = vsyncpa %s13, 0
    loop: start=0, step=1, limit=4
    $region2: #{forward.1} parent=1 // loop_pre_header
      _
    $region3: #{forward.1} parent=1 // loop_header
      %s16 = sphi 0, %s20
      %p17 = scmp.ge.s32.totalorder %s16, 4
      %s26 = sphi 0, %s28
      %s29 = sphi 0, %s26
      %s30 = sphi 0, %s29
      %s46 = sphi 0, %s30
      %s50 = sphi 0, %s50
      %s52 = sphi 0, %s50
      %s53 = sphi 0, %s52
      %s67 = sphi 0, %s53
      %s71 = sphi 0, %s71
      %s73 = sphi 0, %s71
      %s74 = sphi 0, %s73
      %s88 = sphi 0, %s74
      %s92 = sphi 0, %s92
      %s94 = sphi 0, %s92
      %s95 = sphi 0, %s94
      %s109 = sphi 0, %s95
      %s113 = sphi 0, %s113
      %s115 = sphi 0, %s113
      %s116 = sphi 0, %s115
      %s130 = sphi 0, %s116
      %s134 = sphi 0, %s134
      %s136 = sphi 0, %s134
      %s137 = sphi 0, %s136
      %s151 = sphi 0, %s137
      %s155 = sphi 0, %s155
      %s157 = sphi 0, %s155
      %s158 = sphi 0, %s157
      %s172 = sphi 0, %s158
      %s178 = sphi 0, %s180
      %s181 = sphi 0, %s178
      %s182 = sphi 0, %s181
      %s198 = sphi 0, %s182
    $region4: #{forward.1} parent=1 // loop_header_branch
      %19 = sbr.rel (%p17) target = $region8
    $region5: #{forward.1} parent=1 // loop_body
      %s21 = ssub.s32 %s16, 1
      %s22 = ssub.s32 %s16, 2
      %s23 = sadd.s32 %s16, 1
      %s24 = ssub.s32 %s16, %s23
      %p25 = scmp.eq.s32.totalorder %s24, 0
      %s27 = sadd.s32 %s26, 1
      %s28 = scalar_select %p25, %s26, %s27
      %p31 = pneg %p25
      %p32 = scmp.eq.s32.totalorder %s16, 1
      %p33 = por %p31, %p32
      %p34 = scmp.ne.s32.totalorder %s26, %s29
      %p35 = scmp.eq.s32.totalorder %s16, 0
      %p36 = por %p34, %p35
      %p37 = scmp.ne.s32.totalorder %s26, %s29
      %p38 = scmp.eq.s32.totalorder %s21, 1
      %p39 = por %p37, %p38
      %p40 = scmp.ne.s32.totalorder %s29, %s30
      %p41 = scmp.eq.s32.totalorder %s21, 0
      %p42 = por %p40, %p41
      %p43 = scmp.ne.s32.totalorder %s29, %s30
      %p44 = scmp.eq.s32.totalorder %s22, 1
      %p45 = por %p43, %p44
      %p47 = scmp.ne.s32.totalorder %s30, %s46
      %p48 = scmp.eq.s32.totalorder %s22, 0
      %p49 = por %p47, %p48
      %s51 = sadd.s32 %s50, 1
      %p54 = scmp.eq.s32.totalorder %s16, 1
      %p55 = scmp.ne.s32.totalorder %s50, %s52
      %p56 = scmp.eq.s32.totalorder %s16, 0
      %p57 = por %p55, %p56
      %p58 = scmp.ne.s32.totalorder %s50, %s52
      %p59 = scmp.eq.s32.totalorder %s21, 1
      %p60 = por %p58, %p59
      %p61 = scmp.ne.s32.totalorder %s52, %s53
      %p62 = scmp.eq.s32.totalorder %s21, 0
      %p63 = por %p61, %p62
      %p64 = scmp.ne.s32.totalorder %s52, %s53
      %p65 = scmp.eq.s32.totalorder %s22, 1
      %p66 = por %p64, %p65
      %p68 = scmp.ne.s32.totalorder %s53, %s67
      %p69 = scmp.eq.s32.totalorder %s22, 0
      %p70 = por %p68, %p69
      %s72 = sadd.s32 %s71, 1
      %p75 = scmp.eq.s32.totalorder %s16, 1
      %p76 = scmp.ne.s32.totalorder %s71, %s73
      %p77 = scmp.eq.s32.totalorder %s16, 0
      %p78 = por %p76, %p77
      %p79 = scmp.ne.s32.totalorder %s71, %s73
      %p80 = scmp.eq.s32.totalorder %s21, 1
      %p81 = por %p79, %p80
      %p82 = scmp.ne.s32.totalorder %s73, %s74
      %p83 = scmp.eq.s32.totalorder %s21, 0
      %p84 = por %p82, %p83
      %p85 = scmp.ne.s32.totalorder %s73, %s74
      %p86 = scmp.eq.s32.totalorder %s22, 1
      %p87 = por %p85, %p86
      %p89 = scmp.ne.s32.totalorder %s74, %s88
      %p90 = scmp.eq.s32.totalorder %s22, 0
      %p91 = por %p89, %p90
      %s93 = sadd.s32 %s92, 1
      %p96 = scmp.eq.s32.totalorder %s16, 1
      %p97 = scmp.ne.s32.totalorder %s92, %s94
      %p98 = scmp.eq.s32.totalorder %s16, 0
      %p99 = por %p97, %p98
      %p100 = scmp.ne.s32.totalorder %s92, %s94
      %p101 = scmp.eq.s32.totalorder %s21, 1
      %p102 = por %p100, %p101
      %p103 = scmp.ne.s32.totalorder %s94, %s95
      %p104 = scmp.eq.s32.totalorder %s21, 0
      %p105 = por %p103, %p104
      %p106 = scmp.ne.s32.totalorder %s94, %s95
      %p107 = scmp.eq.s32.totalorder %s22, 1
      %p108 = por %p106, %p107
      %p110 = scmp.ne.s32.totalorder %s95, %s109
      %p111 = scmp.eq.s32.totalorder %s22, 0
      %p112 = por %p110, %p111
      %s114 = sadd.s32 %s113, 1
      %p117 = scmp.eq.s32.totalorder %s16, 1
      %p118 = scmp.ne.s32.totalorder %s113, %s115
      %p119 = scmp.eq.s32.totalorder %s16, 0
      %p120 = por %p118, %p119
      %p121 = scmp.ne.s32.totalorder %s113, %s115
      %p122 = scmp.eq.s32.totalorder %s21, 1
      %p123 = por %p121, %p122
      %p124 = scmp.ne.s32.totalorder %s115, %s116
      %p125 = scmp.eq.s32.totalorder %s21, 0
      %p126 = por %p124, %p125
      %p127 = scmp.ne.s32.totalorder %s115, %s116
      %p128 = scmp.eq.s32.totalorder %s22, 1
      %p129 = por %p127, %p128
      %p131 = scmp.ne.s32.totalorder %s116, %s130
      %p132 = scmp.eq.s32.totalorder %s22, 0
      %p133 = por %p131, %p132
      %s135 = sadd.s32 %s134, 1
      %p138 = scmp.eq.s32.totalorder %s16, 1
      %p139 = scmp.ne.s32.totalorder %s134, %s136
      %p140 = scmp.eq.s32.totalorder %s16, 0
      %p141 = por %p139, %p140
      %p142 = scmp.ne.s32.totalorder %s134, %s136
      %p143 = scmp.eq.s32.totalorder %s21, 1
      %p144 = por %p142, %p143
      %p145 = scmp.ne.s32.totalorder %s136, %s137
      %p146 = scmp.eq.s32.totalorder %s21, 0
      %p147 = por %p145, %p146
      %p148 = scmp.ne.s32.totalorder %s136, %s137
      %p149 = scmp.eq.s32.totalorder %s22, 1
      %p150 = por %p148, %p149
      %p152 = scmp.ne.s32.totalorder %s137, %s151
      %p153 = scmp.eq.s32.totalorder %s22, 0
      %p154 = por %p152, %p153
      %s156 = sadd.s32 %s155, 1
      %p159 = scmp.eq.s32.totalorder %s16, 1
      %p160 = scmp.ne.s32.totalorder %s155, %s157
      %p161 = scmp.eq.s32.totalorder %s16, 0
      %p162 = por %p160, %p161
      %p163 = scmp.ne.s32.totalorder %s155, %s157
      %p164 = scmp.eq.s32.totalorder %s21, 1
      %p165 = por %p163, %p164
      %p166 = scmp.ne.s32.totalorder %s157, %s158
      %p167 = scmp.eq.s32.totalorder %s21, 0
      %p168 = por %p166, %p167
      %p169 = scmp.ne.s32.totalorder %s157, %s158
      %p170 = scmp.eq.s32.totalorder %s22, 1
      %p171 = por %p169, %p170
      %p173 = scmp.ne.s32.totalorder %s158, %s172
      %p174 = scmp.eq.s32.totalorder %s22, 0
      %p175 = por %p173, %p174
      %s176 = ssub.s32 %s16, %s23
      %p177 = scmp.eq.s32.totalorder %s176, 0
      %s179 = sadd.s32 %s178, 1
      %s180 = scalar_select %p177, %s178, %s179
      %p183 = pneg %p177
      %p184 = scmp.eq.s32.totalorder %s16, 1
      %p185 = por %p183, %p184
      %p186 = scmp.ne.s32.totalorder %s178, %s181
      %p187 = scmp.eq.s32.totalorder %s16, 0
      %p188 = por %p186, %p187
      %p189 = scmp.ne.s32.totalorder %s178, %s181
      %p190 = scmp.eq.s32.totalorder %s21, 1
      %p191 = por %p189, %p190
      %p192 = scmp.ne.s32.totalorder %s181, %s182
      %p193 = scmp.eq.s32.totalorder %s21, 0
      %p194 = por %p192, %p193
      %p195 = scmp.ne.s32.totalorder %s181, %s182
      %p196 = scmp.eq.s32.totalorder %s22, 1
      %p197 = por %p195, %p196
      %p199 = scmp.ne.s32.totalorder %s182, %s198
      %p200 = scmp.eq.s32.totalorder %s22, 0
      %p201 = por %p199, %p200
      %p202 = scmp.le.s32.totalorder 1, %s16
      %p203 = scmp.lt.s32.totalorder %s16, 3
      %p204 = pnand %p202, %p203
      %p205 = pneg %p204
      // Predicated region
      $region9: #{forward.1} parent=5 // pred_check
        _
      $region10: #{forward.1} parent=5 // pred_check_branch
        %207 = sbr.rel (%p204) target = $region12
      $region11: #{forward.1} parent=5 // pred_region
        %s208 = ssub.s32 %s16, 1
        // Predicated region
        $region13: #{forward.1} parent=11 // pred_check
          %p209 = pneg %p63
        $region14: #{forward.1} parent=11 // pred_check_branch
          %211 = sbr.rel (%p209) target = $region16
        $region15: #{forward.1} parent=11 // pred_region
          _
        $region16: #{forward.1} parent=11 // pred_fallthru
          _
        // Predicated region
        $region17: #{forward.1} parent=11 // pred_check
          %p212 = pneg %p84
        $region18: #{forward.1} parent=11 // pred_check_branch
          %214 = sbr.rel (%p212) target = $region20
        $region19: #{forward.1} parent=11 // pred_region
          _
        $region20: #{forward.1} parent=11 // pred_fallthru
          _
        // Predicated region
        $region21: #{forward.1} parent=11 // pred_check
          %p215 = pneg %p105
        $region22: #{forward.1} parent=11 // pred_check_branch
          %217 = sbr.rel (%p215) target = $region24
        $region23: #{forward.1} parent=11 // pred_region
          _
        $region24: #{forward.1} parent=11 // pred_fallthru
          _
        // Predicated region
        $region25: #{forward.1} parent=11 // pred_check
          %p218 = pneg %p126
        $region26: #{forward.1} parent=11 // pred_check_branch
          %220 = sbr.rel (%p218) target = $region28
        $region27: #{forward.1} parent=11 // pred_region
          _
        $region28: #{forward.1} parent=11 // pred_fallthru
          _
        // Predicated region
        $region29: #{forward.1} parent=11 // pred_check
          %p221 = pneg %p147
        $region30: #{forward.1} parent=11 // pred_check_branch
          %223 = sbr.rel (%p221) target = $region32
        $region31: #{forward.1} parent=11 // pred_region
          _
        $region32: #{forward.1} parent=11 // pred_fallthru
          _
        // Predicated region
        $region33: #{forward.1} parent=11 // pred_check
          %p224 = pneg %p168
        $region34: #{forward.1} parent=11 // pred_check_branch
          %226 = sbr.rel (%p224) target = $region36
        $region35: #{forward.1} parent=11 // pred_region
          _
        $region36: #{forward.1} parent=11 // pred_fallthru
          _
      $region12: #{forward.1} parent=5 // pred_fallthru
        _
      %p227 = scmp.lt.s32.totalorder %s16, 2
      // Predicated region
      $region37: #{forward.1} parent=5 // pred_check
        %p228 = pneg %p227
      $region38: #{forward.1} parent=5 // pred_check_branch
        %230 = sbr.rel (%p228) target = $region40
      $region39: #{forward.1} parent=5 // pred_region
        // Predicated region
        $region41: #{forward.1} parent=39 // pred_check
          %p231 = pneg %p36
        $region42: #{forward.1} parent=39 // pred_check_branch
          %233 = sbr.rel (%p231) target = $region44
        $region43: #{forward.1} parent=39 // pred_region
          %p234 = scmp.lt.s32.totalorder %s16, 1
          %s235 = scalar_select %p234, %s16, 1
          %s236 = smul.addr %s235, 2
          %s237 = smul.addr %s236, 8
          %s238 = scalar_lea.vmem %s0, %s237
        $region44: #{forward.1} parent=39 // pred_fallthru
          _
      $region40: #{forward.1} parent=5 // pred_fallthru
        _
      %p239 = scmp.le.s32.totalorder 1, %s16
      %p240 = scmp.lt.s32.totalorder %s16, 3
      %p241 = pnand %p239, %p240
      %p242 = pneg %p241
      // Predicated region
      $region45: #{forward.1} parent=5 // pred_check
        _
      $region46: #{forward.1} parent=5 // pred_check_branch
        %244 = sbr.rel (%p241) target = $region48
      $region47: #{forward.1} parent=5 // pred_region
        %s245 = ssub.s32 %s16, 1
        %p246 = scmp.lt.s32.totalorder %s21, 1
        %s247 = scalar_select %p246, %s21, 1
        %s248 = smul.addr %s247, 2
        %s249 = smul.addr %s248, 8
        %s250 = scalar_lea.vmem %s0, %s249
        %p251 = pneg %p42
        %p252 = pneg %p39
        %p253 = pneg %p63
        %p254 = pneg %p60
        %p255 = pneg %p84
        %p256 = pneg %p81
        %p257 = pneg %p105
        %p258 = pneg %p102
        %p259 = pneg %p126
        %p260 = pneg %p123
        %p261 = pneg %p147
        %p262 = pneg %p144
        %p263 = pneg %p168
        %p264 = pneg %p165
        %p265 = pneg %p194
        %p266 = pneg %p191
        %s267 = sand.u32 %s181, 1
        %s268 = scalar_lea.sflag [#allocation3], %s267
        %s269 = sand.u32 %s181, 1
        %s270 = scalar_lea.vmem [#allocation2], %s269
        %p271 = scmp.lt.s32.totalorder %s21, 1
        %s272 = scalar_select %p271, %s21, 1
        %s273 = smul.addr %s272, 2
        %s274 = smul.addr %s273, 8
        %s275 = scalar_lea.vmem %s0, %s274
        %v277 = vld [vmem:[%s275] sm:$0xff]
        %v278 = vld [vmem:[%s275 + $0x8] sm:$0xff]
        %vm281 = vcmask 1040384
        %v282 = vrot.slane %v277, 7
        %v283 = vrot.slane %v278, 7
        %v284 = vsel %vm281, %v282, %v283
        %v288 = vsel %vm281, 0.0, %v282
        %v289 = vsel %vm281, %v283, 0.0
        %v290 = vpack.c.bf16 %v284, %v288
        %v291 = vld [vmem:[%s1] sm:$0xf]
        %v292 = vld [vmem:[%s1 + $0x4] sm:$0xf]
        %v293 = vld [vmem:[%s1 + $0x8] sm:$0xf]
        %v294 = vld [vmem:[%s1 + $0xc] sm:$0xf]
        %v295 = vld [vmem:[%s1 + $0x10] sm:$0xf]
        %v296 = vld [vmem:[%s1 + $0x14] sm:$0xf]
        %v297 = vpack.c.bf16 %v289, %v289
        %s298 = scalar_lea.vmem %s1, 24
        %v299 = vld [vmem:[%s298] sm:$0xf]
        %v300 = vld [vmem:[%s298 + $0x4] sm:$0xf]
        %v301 = vld [vmem:[%s298 + $0x8] sm:$0xf]
        %v302 = vld [vmem:[%s298 + $0xc] sm:$0xf]
        %v303 = vld [vmem:[%s298 + $0x10] sm:$0xf]
        %v304 = vld [vmem:[%s298 + $0x14] sm:$0xf]
        %vm305 = vsmask.f32 7424
        %v307 = vshrl.u32 %v290, 16
        %v309 = vshll.u32 %v290, 16
        %v311 = vrot.slane %v309, 1
        %v312 = vor.u32 %v307, %v311
        %v314 = vshll.u32 %v297, 16
        %v316 = vrot.slane %v314, 1
        %v317 = vsel %vm305, %v312, %v316
        %v324 = vunpack.c.l.b16 %v299
        %v325 = vunpack.c.l.b16 %v300
        %v326 = vunpack.c.l.b16 %v301
        %v327 = vunpack.c.l.b16 %v302
        %v328 = vunpack.c.l.b16 %v303
        %v329 = vunpack.c.l.b16 %v304
        %v330 = vpack.c.b16 %v325, %v324
        %v331 = vpack.c.b16 %v327, %v326
        %v332 = vpack.c.b16 %v329, %v328
        %vm336 = vcmask 392192
        %v338 = vsel %vm336, %v317, 0
        %340 = vmatpush.bf16.msra.mxu0 0
        %341 = vmatpush.bf16.msra.mxu0 0
        %342 = vmatpush.bf16.msra.mxu0 0
        %343 = vmatpush.bf16.msra.mxu0 0
        %344 = vmatpush.bf16.msra.mxu0 0
        %345 = vmatpush.bf16.msra.mxu0 %v332
        %346 = vmatpush.bf16.msra.mxu0 %v331
        %347 = vmatpush.bf16.msra.mxu0 %v330
        %348 = vmatmul.bf16.gmra.mxu0 %v338
        %v349 = vpop.f32.mrf.mxu0
        %v350 = vadd.f32 0.0, %v349
        %v351 = vpop.f32.mrf.mxu0
        %v352 = vadd.f32 0.0, %v351
        %353 = vdwg.mxu0
        %v360 = vunpack.c.l.b16 %v291
        %v361 = vunpack.c.l.b16 %v292
        %v362 = vunpack.c.l.b16 %v293
        %v363 = vunpack.c.l.b16 %v294
        %v364 = vunpack.c.l.b16 %v295
        %v365 = vunpack.c.l.b16 %v296
        %v366 = vpack.c.b16 %v361, %v360
        %v367 = vpack.c.b16 %v363, %v362
        %v368 = vpack.c.b16 %v365, %v364
        %v372 = vsel %vm336, %v290, 0
        %374 = vmatpush.bf16.msra.mxu0 0
        %375 = vmatpush.bf16.msra.mxu0 0
        %376 = vmatpush.bf16.msra.mxu0 0
        %377 = vmatpush.bf16.msra.mxu0 0
        %378 = vmatpush.bf16.msra.mxu0 0
        %379 = vmatpush.bf16.msra.mxu0 %v368
        %380 = vmatpush.bf16.msra.mxu0 %v367
        %381 = vmatpush.bf16.msra.mxu0 %v366
        %382 = vmatmul.bf16.gmra.mxu0 %v372
        %v383 = vpop.f32.mrf.mxu0
        %v384 = vadd.f32 %v350, %v383
        %v385 = vpop.f32.mrf.mxu0
        %v386 = vadd.f32 %v352, %v385
        %387 = vdwg.mxu0
        %s388 = scalar_lea.vmem %s1, 48
        %v389 = vld [vmem:[%s388] sm:$0xf]
        %v390 = vld [vmem:[%s388 + $0x4] sm:$0xf]
        %v391 = vld [vmem:[%s388 + $0x8] sm:$0xf]
        %v392 = vld [vmem:[%s388 + $0xc] sm:$0xf]
        %v393 = vld [vmem:[%s388 + $0x10] sm:$0xf]
        %v394 = vld [vmem:[%s388 + $0x14] sm:$0xf]
        %vm397 = vcmask 1046528
        %v398 = vrot.slane %v290, 1
        %v399 = vrot.slane %v297, 1
        %v400 = vsel %vm397, %v398, %v399
        %v407 = vunpack.c.l.b16 %v389
        %v408 = vunpack.c.l.b16 %v390
        %v409 = vunpack.c.l.b16 %v391
        %v410 = vunpack.c.l.b16 %v392
        %v411 = vunpack.c.l.b16 %v393
        %v412 = vunpack.c.l.b16 %v394
        %v413 = vpack.c.b16 %v408, %v407
        %v414 = vpack.c.b16 %v410, %v409
        %v415 = vpack.c.b16 %v412, %v411
        %v420 = vsel %vm336, %v400, 0
        %422 = vmatpush.bf16.msra.mxu0 0
        %423 = vmatpush.bf16.msra.mxu0 0
        %424 = vmatpush.bf16.msra.mxu0 0
        %425 = vmatpush.bf16.msra.mxu0 0
        %426 = vmatpush.bf16.msra.mxu0 0
        %427 = vmatpush.bf16.msra.mxu0 %v415
        %428 = vmatpush.bf16.msra.mxu0 %v414
        %429 = vmatpush.bf16.msra.mxu0 %v413
        %430 = vmatmul.bf16.gmra.mxu0 %v420
        %v431 = vpop.f32.mrf.mxu0
        %v432 = vadd.f32 0.0, %v431
        %v433 = vpop.f32.mrf.mxu0
        %v434 = vadd.f32 0.0, %v433
        %435 = vdwg.mxu0
        %v436 = vadd.f32 %v384, %v432
        %v437 = vadd.f32 %v386, %v434
        %440 = vrot.lane.b32.xlu0 %v436, 64
        %v441 = vpop.permute.xlu0 %440
        %442 = vrot.lane.b32.xlu0 %v437, 64
        %v443 = vpop.permute.xlu0 %442
        %v446 = vmax.f32 %v436, %v441
        %v447 = vmax.f32 %v437, %v443
        %v448 = vld [vmem:[%s2] sm:$0x1]
        %v450 = vrot.slane %v446, 1
        %v452 = vmax.f32 %v446, %v450
        %v453 = vadd.f32 %v452, %v448
        %v454 = vmax.f32 %v453, 0.0
        %v456 = vperm.slane %v448, 0
        %v458 = vadd.f32 %v452, %v456
        %v459 = vmax.f32 %v458, 0.0
        %v461 = vrot.slane %v447, 1
        %v463 = vmax.f32 %v447, %v461
        %v464 = vadd.f32 %v463, %v448
        %v465 = vmax.f32 %v464, 0.0
        %v466 = vadd.f32 %v463, %v456
        %v467 = vmax.f32 %v466, 0.0
        %v469 = vrot.slane %v454, 7
        %v472 = vrot.slane %v459, 1
        %v474 = vrot.slane %v459, 2
        %v477 = vrot.slane %v465, 3
        %v480 = vrot.slane %v467, 4
        %v482 = vrot.slane %v467, 5
        %v484 = vrot.slane %v467, 6
        %v486 = vsel %vm281, 0.0, %v469
        %vm487 = vcmask 1041408
        %v488 = vsel %vm487, %v486, %v459
        %vm489 = vcmask 1042432
        %v490 = vsel %vm489, %v488, %v472
        %vm491 = vcmask 1043456
        %v492 = vsel %vm491, %v490, %v474
        %vm493 = vcmask 1044480
        %v494 = vsel %vm493, %v492, %v477
        %vm495 = vcmask 1045504
        %v496 = vsel %vm495, %v494, %v480
        %vm497 = vcmask 1046528
        %v498 = vsel %vm497, %v496, %v482
        %v499 = vsel %vm281, %v484, 0.0
        %v500 = vpack.c.bf16 %v498, %v498
        %v501 = vld [vmem:[%s3] sm:$0xf]
        %v502 = vld [vmem:[%s3 + $0x4] sm:$0xf]
        %v503 = vld [vmem:[%s3 + $0x8] sm:$0xf]
        %v504 = vld [vmem:[%s3 + $0xc] sm:$0xf]
        %v505 = vld [vmem:[%s3 + $0x10] sm:$0xf]
        %v506 = vld [vmem:[%s3 + $0x14] sm:$0xf]
        %v507 = vld [vmem:[%s3 + $0x18] sm:$0xf]
        %v508 = vld [vmem:[%s3 + $0x1c] sm:$0xf]
        %v509 = vpack.c.bf16 %v499, %v498
        %s510 = scalar_lea.vmem %s3, 32
        %v511 = vld [vmem:[%s510] sm:$0xf]
        %v512 = vld [vmem:[%s510 + $0x4] sm:$0xf]
        %v513 = vld [vmem:[%s510 + $0x8] sm:$0xf]
        %v514 = vld [vmem:[%s510 + $0xc] sm:$0xf]
        %v515 = vld [vmem:[%s510 + $0x10] sm:$0xf]
        %v516 = vld [vmem:[%s510 + $0x14] sm:$0xf]
        %v517 = vld [vmem:[%s510 + $0x18] sm:$0xf]
        %v518 = vld [vmem:[%s510 + $0x1c] sm:$0xf]
        %v520 = vshrl.u32 %v509, 16
        %v522 = vshll.u32 %v509, 16
        %v524 = vrot.slane %v522, 1
        %v525 = vor.u32 %v520, %v524
        %v534 = vunpack.c.l.b16 %v511
        %v535 = vunpack.c.l.b16 %v512
        %v536 = vunpack.c.l.b16 %v513
        %v537 = vunpack.c.l.b16 %v514
        %v538 = vunpack.c.l.b16 %v515
        %v539 = vunpack.c.l.b16 %v516
        %v540 = vunpack.c.l.b16 %v517
        %v541 = vunpack.c.l.b16 %v518
        %v542 = vpack.c.b16 %v535, %v534
        %v543 = vpack.c.b16 %v537, %v536
        %v544 = vpack.c.b16 %v539, %v538
        %v545 = vpack.c.b16 %v541, %v540
        %vm550 = vcmask 523264
        %v552 = vsel %vm550, %v525, 0
        %554 = vmatpush.bf16.msra.mxu0 0
        %555 = vmatpush.bf16.msra.mxu0 0
        %556 = vmatpush.bf16.msra.mxu0 0
        %557 = vmatpush.bf16.msra.mxu0 0
        %558 = vmatpush.bf16.msra.mxu0 %v545
        %559 = vmatpush.bf16.msra.mxu0 %v544
        %560 = vmatpush.bf16.msra.mxu0 %v543
        %561 = vmatpush.bf16.msra.mxu0 %v542
        %562 = vmatmul.bf16.gmra.mxu0 %v552
        %v563 = vpop.f32.mrf.mxu0
        %v564 = vadd.f32 0.0, %v563
        %v565 = vpop.f32.mrf.mxu0
        %566 = vdwg.mxu0
        %v575 = vunpack.c.l.b16 %v501
        %v576 = vunpack.c.l.b16 %v502
        %v577 = vunpack.c.l.b16 %v503
        %v578 = vunpack.c.l.b16 %v504
        %v579 = vunpack.c.l.b16 %v505
        %v580 = vunpack.c.l.b16 %v506
        %v581 = vunpack.c.l.b16 %v507
        %v582 = vunpack.c.l.b16 %v508
        %v583 = vpack.c.b16 %v576, %v575
        %v584 = vpack.c.b16 %v578, %v577
        %v585 = vpack.c.b16 %v580, %v579
        %v586 = vpack.c.b16 %v582, %v581
        %v592 = vsel %vm550, %v500, 0
        %594 = vmatpush.bf16.msra.mxu0 0
        %595 = vmatpush.bf16.msra.mxu0 0
        %596 = vmatpush.bf16.msra.mxu0 0
        %597 = vmatpush.bf16.msra.mxu0 0
        %598 = vmatpush.bf16.msra.mxu0 %v586
        %599 = vmatpush.bf16.msra.mxu0 %v585
        %600 = vmatpush.bf16.msra.mxu0 %v584
        %601 = vmatpush.bf16.msra.mxu0 %v583
        %602 = vmatmul.bf16.gmra.mxu0 %v592
        %v603 = vpop.f32.mrf.mxu0
        %v604 = vadd.f32 %v564, %v603
        %v605 = vpop.f32.mrf.mxu0
        %606 = vdwg.mxu0
        %s607 = scalar_lea.vmem %s3, 64
        %v608 = vld [vmem:[%s607] sm:$0xf]
        %v609 = vld [vmem:[%s607 + $0x4] sm:$0xf]
        %v610 = vld [vmem:[%s607 + $0x8] sm:$0xf]
        %v611 = vld [vmem:[%s607 + $0xc] sm:$0xf]
        %v612 = vld [vmem:[%s607 + $0x10] sm:$0xf]
        %v613 = vld [vmem:[%s607 + $0x14] sm:$0xf]
        %v614 = vld [vmem:[%s607 + $0x18] sm:$0xf]
        %v615 = vld [vmem:[%s607 + $0x1c] sm:$0xf]
        %v617 = vrot.slane %v509, 1
        %v626 = vunpack.c.l.b16 %v608
        %v627 = vunpack.c.l.b16 %v609
        %v628 = vunpack.c.l.b16 %v610
        %v629 = vunpack.c.l.b16 %v611
        %v630 = vunpack.c.l.b16 %v612
        %v631 = vunpack.c.l.b16 %v613
        %v632 = vunpack.c.l.b16 %v614
        %v633 = vunpack.c.l.b16 %v615
        %v634 = vpack.c.b16 %v627, %v626
        %v635 = vpack.c.b16 %v629, %v628
        %v636 = vpack.c.b16 %v631, %v630
        %v637 = vpack.c.b16 %v633, %v632
        %v643 = vsel %vm550, %v617, 0
        %645 = vmatpush.bf16.msra.mxu0 0
        %646 = vmatpush.bf16.msra.mxu0 0
        %647 = vmatpush.bf16.msra.mxu0 0
        %648 = vmatpush.bf16.msra.mxu0 0
        %649 = vmatpush.bf16.msra.mxu0 %v637
        %650 = vmatpush.bf16.msra.mxu0 %v636
        %651 = vmatpush.bf16.msra.mxu0 %v635
        %652 = vmatpush.bf16.msra.mxu0 %v634
        %653 = vmatmul.bf16.gmra.mxu0 %v643
        %v654 = vpop.f32.mrf.mxu0
        %v655 = vadd.f32 0.0, %v654
        %v656 = vpop.f32.mrf.mxu0
        %657 = vdwg.mxu0
        %v658 = vadd.f32 %v604, %v655
        %660 = vrot.lane.b32.xlu0 %v658, 64
        %v661 = vpop.permute.xlu0 %660
        %v663 = vmax.f32 %v658, %v661
        %v664 = vld [vmem:[%s4] sm:$0x1]
        %v665 = vld [vmem:[%s6] sm:$0x1]
        %v667 = vrot.slane %v663, 1
        %v669 = vmax.f32 %v663, %v667
        %v670 = vadd.f32 %v669, %v664
        %v671 = vmax.f32 %v670, 0.0
        %v672 = vpack.c.bf16 %v671, %v671
        %v673 = vld [vmem:[%s5] sm:$0xf]
        %v674 = vld [vmem:[%s5 + $0x4] sm:$0xf]
        %v675 = vld [vmem:[%s5 + $0x8] sm:$0xf]
        %v676 = vld [vmem:[%s5 + $0xc] sm:$0xf]
        %v677 = vld [vmem:[%s5 + $0x10] sm:$0xf]
        %v678 = vld [vmem:[%s5 + $0x14] sm:$0xf]
        %v679 = vld [vmem:[%s5 + $0x18] sm:$0xf]
        %v680 = vld [vmem:[%s5 + $0x1c] sm:$0xf]
        %v689 = vunpack.c.l.b16 %v673
        %v690 = vunpack.c.l.b16 %v674
        %v691 = vunpack.c.l.b16 %v675
        %v692 = vunpack.c.l.b16 %v676
        %v693 = vunpack.c.l.b16 %v677
        %v694 = vunpack.c.l.b16 %v678
        %v695 = vunpack.c.l.b16 %v679
        %v696 = vunpack.c.l.b16 %v680
        %v697 = vpack.c.b16 %v690, %v689
        %v698 = vpack.c.b16 %v692, %v691
        %v699 = vpack.c.b16 %v694, %v693
        %v700 = vpack.c.b16 %v696, %v695
        %v706 = vsel %vm550, %v672, 0
        %708 = vmatpush.bf16.msra.mxu0 0
        %709 = vmatpush.bf16.msra.mxu0 0
        %710 = vmatpush.bf16.msra.mxu0 0
        %711 = vmatpush.bf16.msra.mxu0 0
        %712 = vmatpush.bf16.msra.mxu0 %v700
        %713 = vmatpush.bf16.msra.mxu0 %v699
        %714 = vmatpush.bf16.msra.mxu0 %v698
        %715 = vmatpush.bf16.msra.mxu0 %v697
        %716 = vmatmul.bf16.gmra.mxu0 %v706
        %v717 = vpop.f32.mrf.mxu0
        %v718 = vadd.f32 0.0, %v717
        %v719 = vpop.f32.mrf.mxu0
        %720 = vdwg.mxu0
        %v721 = vadd.f32 %v665, %v718
        %v723 = vperm.slane %v664, 0
        %v725 = vadd.f32 %v669, %v723
        %v726 = vmax.f32 %v725, 0.0
        %v727 = vpack.c.bf16 %v726, %v726
        %s728 = scalar_lea.vmem %s5, 32
        %v729 = vld [vmem:[%s728] sm:$0xf]
        %v730 = vld [vmem:[%s728 + $0x4] sm:$0xf]
        %v731 = vld [vmem:[%s728 + $0x8] sm:$0xf]
        %v732 = vld [vmem:[%s728 + $0xc] sm:$0xf]
        %v733 = vld [vmem:[%s728 + $0x10] sm:$0xf]
        %v734 = vld [vmem:[%s728 + $0x14] sm:$0xf]
        %v735 = vld [vmem:[%s728 + $0x18] sm:$0xf]
        %v736 = vld [vmem:[%s728 + $0x1c] sm:$0xf]
        %v738 = vrot.slane %v727, 1
        %v747 = vunpack.c.l.b16 %v729
        %v748 = vunpack.c.l.b16 %v730
        %v749 = vunpack.c.l.b16 %v731
        %v750 = vunpack.c.l.b16 %v732
        %v751 = vunpack.c.l.b16 %v733
        %v752 = vunpack.c.l.b16 %v734
        %v753 = vunpack.c.l.b16 %v735
        %v754 = vunpack.c.l.b16 %v736
        %v755 = vpack.c.b16 %v748, %v747
        %v756 = vpack.c.b16 %v750, %v749
        %v757 = vpack.c.b16 %v752, %v751
        %v758 = vpack.c.b16 %v754, %v753
        %v764 = vsel %vm550, %v738, 0
        %766 = vmatpush.bf16.msra.mxu0 0
        %767 = vmatpush.bf16.msra.mxu0 0
        %768 = vmatpush.bf16.msra.mxu0 0
        %769 = vmatpush.bf16.msra.mxu0 0
        %770 = vmatpush.bf16.msra.mxu0 %v758
        %771 = vmatpush.bf16.msra.mxu0 %v757
        %772 = vmatpush.bf16.msra.mxu0 %v756
        %773 = vmatpush.bf16.msra.mxu0 %v755
        %774 = vmatmul.bf16.gmra.mxu0 %v764
        %v775 = vpop.f32.mrf.mxu0
        %v776 = vadd.f32 0.0, %v775
        %v777 = vpop.f32.mrf.mxu0
        %778 = vdwg.mxu0
        %v779 = vadd.f32 %v721, %v776
        %s780 = scalar_lea.vmem %s5, 64
        %v781 = vld [vmem:[%s780] sm:$0xf]
        %v782 = vld [vmem:[%s780 + $0x4] sm:$0xf]
        %v783 = vld [vmem:[%s780 + $0x8] sm:$0xf]
        %v784 = vld [vmem:[%s780 + $0xc] sm:$0xf]
        %v785 = vld [vmem:[%s780 + $0x10] sm:$0xf]
        %v786 = vld [vmem:[%s780 + $0x14] sm:$0xf]
        %v787 = vld [vmem:[%s780 + $0x18] sm:$0xf]
        %v788 = vld [vmem:[%s780 + $0x1c] sm:$0xf]
        %v789 = vrot.slane %v727, 2
        %v798 = vunpack.c.l.b16 %v781
        %v799 = vunpack.c.l.b16 %v782
        %v800 = vunpack.c.l.b16 %v783
        %v801 = vunpack.c.l.b16 %v784
        %v802 = vunpack.c.l.b16 %v785
        %v803 = vunpack.c.l.b16 %v786
        %v804 = vunpack.c.l.b16 %v787
        %v805 = vunpack.c.l.b16 %v788
        %v806 = vpack.c.b16 %v799, %v798
        %v807 = vpack.c.b16 %v801, %v800
        %v808 = vpack.c.b16 %v803, %v802
        %v809 = vpack.c.b16 %v805, %v804
        %v815 = vsel %vm550, %v789, 0
        %817 = vmatpush.bf16.msra.mxu0 0
        %818 = vmatpush.bf16.msra.mxu0 0
        %819 = vmatpush.bf16.msra.mxu0 0
        %820 = vmatpush.bf16.msra.mxu0 0
        %821 = vmatpush.bf16.msra.mxu0 %v809
        %822 = vmatpush.bf16.msra.mxu0 %v808
        %823 = vmatpush.bf16.msra.mxu0 %v807
        %824 = vmatpush.bf16.msra.mxu0 %v806
        %825 = vmatmul.bf16.gmra.mxu0 %v815
        %v826 = vpop.f32.mrf.mxu0
        %v827 = vadd.f32 0.0, %v826
        %v828 = vpop.f32.mrf.mxu0
        %829 = vdwg.mxu0
        %v830 = vadd.f32 %v779, %v827
        %s831 = scalar_lea.vmem %s5, 96
        %v832 = vld [vmem:[%s831] sm:$0xf]
        %v833 = vld [vmem:[%s831 + $0x4] sm:$0xf]
        %v834 = vld [vmem:[%s831 + $0x8] sm:$0xf]
        %v835 = vld [vmem:[%s831 + $0xc] sm:$0xf]
        %v836 = vld [vmem:[%s831 + $0x10] sm:$0xf]
        %v837 = vld [vmem:[%s831 + $0x14] sm:$0xf]
        %v838 = vld [vmem:[%s831 + $0x18] sm:$0xf]
        %v839 = vld [vmem:[%s831 + $0x1c] sm:$0xf]
        %v840 = vrot.slane %v727, 3
        %v849 = vunpack.c.l.b16 %v832
        %v850 = vunpack.c.l.b16 %v833
        %v851 = vunpack.c.l.b16 %v834
        %v852 = vunpack.c.l.b16 %v835
        %v853 = vunpack.c.l.b16 %v836
        %v854 = vunpack.c.l.b16 %v837
        %v855 = vunpack.c.l.b16 %v838
        %v856 = vunpack.c.l.b16 %v839
        %v857 = vpack.c.b16 %v850, %v849
        %v858 = vpack.c.b16 %v852, %v851
        %v859 = vpack.c.b16 %v854, %v853
        %v860 = vpack.c.b16 %v856, %v855
        %v866 = vsel %vm550, %v840, 0
        %868 = vmatpush.bf16.msra.mxu0 0
        %869 = vmatpush.bf16.msra.mxu0 0
        %870 = vmatpush.bf16.msra.mxu0 0
        %871 = vmatpush.bf16.msra.mxu0 0
        %872 = vmatpush.bf16.msra.mxu0 %v860
        %873 = vmatpush.bf16.msra.mxu0 %v859
        %874 = vmatpush.bf16.msra.mxu0 %v858
        %875 = vmatpush.bf16.msra.mxu0 %v857
        %876 = vmatmul.bf16.gmra.mxu0 %v866
        %v877 = vpop.f32.mrf.mxu0
        %v878 = vadd.f32 0.0, %v877
        %v879 = vpop.f32.mrf.mxu0
        %880 = vdwg.mxu0
        %v881 = vadd.f32 %v830, %v878
        %882 = vst [vmem:[%s270] sm:$0x1] %v881
        %s883 = sand.u32 %s181, 1
        %s884 = scalar_lea.sflag [#allocation3], %s883
        %s885 = sand.u32 %s181, 1
        %s886 = scalar_lea.vmem [#allocation2], %s885
        // Predicated region
        $region49: #{forward.1} parent=47 // pred_check
          %p887 = pneg %p191
        $region50: #{forward.1} parent=47 // pred_check_branch
          %889 = sbr.rel (%p887) target = $region52
        $region51: #{forward.1} parent=47 // pred_region
          %891 = vsyncadd %s884, 0
          %s892 = scalar_lea.hbm %s7, %s21
          %s894 = sshll.u32 %s886, 4
          %s895 = int_to_ptr.vmem [resolvable:$true] %s894
          %s896 = sshll.u32 %s892, 4
          %s897 = int_to_ptr.hbm [resolvable:$true] %s896
          %899 = dma.vmem_to_hbm [thread:$0]  %s895, 16, %s897, %s884
        $region52: #{forward.1} parent=47 // pred_fallthru
          _
      $region48: #{forward.1} parent=5 // pred_fallthru
        _
      %p900 = scmp.le.s32.totalorder 2, %s16
      // Predicated region
      $region53: #{forward.1} parent=5 // pred_check
        %p901 = pneg %p900
      $region54: #{forward.1} parent=5 // pred_check_branch
        %903 = sbr.rel (%p901) target = $region56
      $region55: #{forward.1} parent=5 // pred_region
        %s904 = ssub.s32 %s16, 2
        // Predicated region
        $region57: #{forward.1} parent=55 // pred_check
          %p905 = pneg %p197
        $region58: #{forward.1} parent=55 // pred_check_branch
          %907 = sbr.rel (%p905) target = $region60
        $region59: #{forward.1} parent=55 // pred_region
          %s908 = sand.u32 %s182, 1
          %s909 = scalar_lea.sflag [#allocation3], %s908
          %s910 = sand.u32 %s182, 1
          %s911 = scalar_lea.vmem [#allocation2], %s910
          %913 = dma.done %s909, 16
        $region60: #{forward.1} parent=55 // pred_fallthru
          _
      $region56: #{forward.1} parent=5 // pred_fallthru
        _
    $region6: #{forward.1} parent=1 // loop_footer
      %s20 = sadd.s32 1, %s16
    $region7: #{forward.1} parent=1 // loop_footer_branch
      %15 = sbr.rel target = $region3
    $region8: #{forward.1} parent=1 // loop_exit
      _
    %914 = vsyncpa [#allocation3], 1
    %s915 = scalar_lea.sflag [#allocation3], 1
    %916 = vsyncpa %s915, 1

</llo_original>
